<compile_context>
chip_gen: v6e
topology: v6e:2x2x1
jax: 0.10.0
libtpu: 0.0.40
codegen_flags: <defaults>
</compile_context>

<pallas_src>
import functools
import math

import jax
import jax.numpy as jnp
from jax.experimental import pallas as pl
from jax.experimental.pallas import tpu as pltpu


def _round_up(x, m):
    return ((x + m - 1) // m) * m


def _vmem_capacity_bytes():
    try:
        info = pltpu.get_tpu_info()
        cap = int(getattr(info, "vmem_capacity_bytes", 0) or 0)
        if cap > 0:
            return cap
    except Exception:
        pass
    return 64 << 20            # conservative fallback (v7x per-TC size)


def _vmem_budget_bytes():
    # ~15% headroom for compiler scratch / pipeline buffers:
    # v7x (64 MiB) -> ~54 MiB, v5e/v6e (128 MiB) -> ~108 MiB.
    return int(_vmem_capacity_bytes() * 0.85)


def _fused_residency_bytes(n, c_in0, c_pad, w_max, param_bytes):
    return (2 * 2 * n * n              # bf16 adjacency block, double buffered
            + 2 * 4 * n * c_in0        # f32 features, double buffered
            + 2 * 4 * n * c_pad        # f32 output, double buffered
            + 4 * 4 * n * w_max        # live f32 intermediates inside the body
            + param_bytes
            + (4 << 20))               # slack


def _fused_param_geometry(params, c_in0):
    c_out_real = params[-1][0].shape[1]
    c_pad = _round_up(c_out_real, 128)
    w_max = max([c_in0, c_pad] + [w.shape[1] for (w, _) in params])
    param_bytes = (sum(int(w.size + b.size) for (w, b) in params) * 4
                   + 4 * c_pad * (params[-1][0].shape[0] + 1))
    return c_out_real, c_pad, w_max, param_bytes


def fused_max_nodes(params, c_in0):
    """Largest N for which the whole-stack fused kernel fits this chip's VMEM."""
    _, c_pad, w_max, param_bytes = _fused_param_geometry(params, c_in0)
    budget = _vmem_budget_bytes()
    best, n = 128, 128
    while n <= 8192:
        if _fused_residency_bytes(n, c_in0, c_pad, w_max, param_bytes) <= budget:
            best = n
        n += 128
    return best


# ----------------------------------------------------------------------------
# Fused kernel: all GCN layers + sigmoid + column normalization, one view per
# grid step (views sharded across TensorCores on v7x via "parallel").
# ----------------------------------------------------------------------------
def _fused_stack_kernel(*refs, n_layers, c_out_real, n_nodes, extra_scale):
    adj_ref, x_ref = refs[0], refs[1]
    o_ref = refs[-1]
    wb_refs = refs[2:-1]

    adj = adj_ref[...]                           # bf16, resident for all layers
    h = x_ref[...]                               # f32
    for layer in range(n_layers):
        w_ref = wb_refs[2 * layer]
        b_ref = wb_refs[2 * layer + 1]
        c_in, c_out = w_ref.shape
        h_bf = h.astype(jnp.bfloat16)
        w_bf = w_ref[...].astype(jnp.bfloat16)
        if c_in <= c_out:
            # (A @ H) @ W : the N^2-sized matmul uses the smaller width c_in.
            ah = jnp.dot(adj, h_bf, preferred_element_type=jnp.float32)
            h = jnp.dot(ah.astype(jnp.bfloat16), w_bf,
                        preferred_element_type=jnp.float32) + b_ref[...]
        else:
            # A @ (H @ W) : the N^2-sized matmul uses the smaller width c_out.
            hw = jnp.dot(h_bf, w_bf, preferred_element_type=jnp.float32)
            h = jnp.dot(adj, hw.astype(jnp.bfloat16),
                        preferred_element_type=jnp.float32) + b_ref[...]
        if layer < n_layers - 1:
            h = jax.nn.sigmoid(h)                # f32 activation (v5e-safe)

    # Column normalization: (h - mean) / std (unbiased, ddof=1) * extra_scale.
    mean = jnp.mean(h, axis=0, keepdims=True)
    xc = h - mean
    var = jnp.sum(xc * xc, axis=0, keepdims=True) * (1.0 / float(n_nodes - 1))
    # Lanes >= c_out_real are zero-padded (weights padded with zeros); guard
    # their var so rsqrt stays finite. Real lanes keep exact torch semantics.
    lane = jax.lax.broadcasted_iota(jnp.int32, var.shape, 1)
    var = jnp.where(lane < c_out_real, var, 1.0)
    inv_std = jax.lax.rsqrt(var) * jnp.float32(extra_scale)   # EUP rsqrt
    o_ref[...] = (xc * inv_std).astype(o_ref.dtype)


def gcn_stack_fused_norm(params, adj_stack, x_stack, extra_scale):
    """adj_stack: (V, N, N) bf16, x_stack: (V, N, C_in) f32  ->  (V, N, C_out)."""
    # TODO(synk): stream the adjacency with pltpu.emit_pipeline (adj in pl.ANY,
    # H resident) to overlap the N^2 DMA with MXU within a view and lift the
    # residency bound entirely; also split rows across both v7x TensorCores
    # for the single-view eval call.
    n_views, n, _ = adj_stack.shape
    c_in0 = x_stack.shape[-1]
    c_out_real, c_pad, w_max, param_bytes = _fused_param_geometry(params, c_in0)

    # Pad last-layer weight/bias to a lane-dense output width (zero columns).
    w_last, b_last = params[-1]
    padded_params = list(params[:-1]) + [
        (jnp.pad(w_last, ((0, 0), (0, c_pad - c_out_real))),
         jnp.pad(b_last, ((0, 0), (0, c_pad - c_out_real)))),
    ]
    n_layers = len(padded_params)

    kernel = functools.partial(
        _fused_stack_kernel, n_layers=n_layers, c_out_real=c_out_real,
        n_nodes=n, extra_scale=extra_scale)

    in_specs = [pl.BlockSpec((None, n, n), lambda v: (v, 0, 0)),
                pl.BlockSpec((None, n, c_in0), lambda v: (v, 0, 0))]
    flat_wb = []
    for (w, b) in padded_params:
        in_specs.append(pl.BlockSpec(w.shape, lambda v: (0, 0)))
        in_specs.append(pl.BlockSpec(b.shape, lambda v: (0, 0)))
        flat_wb.extend([w, b])
    out_spec = pl.BlockSpec((None, n, c_pad), lambda v: (v, 0, 0))

    # Advisory cost estimate so XLA schedules the surrounding glue around us.
    flops = 0
    transcendentals = 0
    for layer, (w, _) in enumerate(padded_params):
        ci, co = w.shape
        flops += n_views * (2 * n * n * min(ci, co) + 2 * n * ci * co)
        if layer < n_layers - 1:
            transcendentals += n_views * n * co      # sigmoid
    transcendentals += n_views * c_pad               # rsqrt
    bytes_accessed = (n_views * (2 * n * n + 4 * n * c_in0 + 4 * n * c_pad)
                      + param_bytes)

    budget = _vmem_budget_bytes()
    est = _fused_residency_bytes(n, c_in0, c_pad, w_max, param_bytes)
    vmem_limit = int(min(budget, max(16 << 20, est)))

    out = pl.pallas_call(
        kernel,
        out_shape=jax.ShapeDtypeStruct((n_views, n, c_pad), jnp.float32),
        grid_spec=pltpu.PrefetchScalarGridSpec(
            num_scalar_prefetch=0,
            grid=(n_views,),
            in_specs=in_specs,
            out_specs=out_spec),
        compiler_params=pltpu.CompilerParams(
            dimension_semantics=("parallel",),     # one view per TC on v7x
            vmem_limit_bytes=vmem_limit),
        cost_estimate=pl.CostEstimate(
            flops=int(flops),
            transcendentals=int(transcendentals),
            bytes_accessed=int(bytes_accessed)),
    )(adj_stack, x_stack, *flat_wb)
    return out[:, :, :c_out_real]


# ----------------------------------------------------------------------------
# Tiled path for large N (dense adjacency no longer fits VMEM as one block).
# A @ H is a (row-tile, k-tile) grid with a f32 VMEM accumulator; H stays
# fully resident in VMEM; the channel projection + bias + sigmoid are fused
# into the finalize branch; stored widths are padded to multiples of 128.
# ----------------------------------------------------------------------------
def _agg_tiled_kernel(*refs, apply_sigmoid, project, tk):
    if project:
        adj_ref, h_ref, w_ref, b_ref, o_ref, acc_ref = refs
    else:
        adj_ref, h_ref, b_ref, o_ref, acc_ref = refs
    k = pl.program_id(1)

    @pl.when(k == 0)
    def _():
        acc_ref[...] = jnp.zeros_like(acc_ref)

    kstart = pl.multiple_of(k * tk, tk)
    h_blk = h_ref[pl.ds(kstart, tk), :].astype(jnp.bfloat16)
    acc_ref[...] += jnp.dot(adj_ref[...], h_blk,          # adj already bf16
                            preferred_element_type=jnp.float32)

    @pl.when(k == pl.num_programs(1) - 1)
    def _():
        res = acc_ref[...]
        if project:
            res = jnp.dot(res.astype(jnp.bfloat16),
                          w_ref[...].astype(jnp.bfloat16),
                          preferred_element_type=jnp.float32)
        res = res + b_ref[...]
        if apply_sigmoid:
            res = jax.nn.sigmoid(res)
        o_ref[...] = res.astype(o_ref.dtype)


def agg_project(adj, h, w, b, apply_sigmoid, tile, vmem_limit):
    """out = sigmoid?( (A @ H) [@ W] + b ). adj: (Np,Np) bf16, h: (Np,Ch) f32."""
    n_pad = adj.shape[0]
    c_h = h.shape[1]
    project = w is not None
    c_out = w.shape[1] if project else c_h
    kernel = functools.partial(_agg_tiled_kernel, apply_sigmoid=apply_sigmoid,
                               project=project, tk=tile)
    in_specs = [pl.BlockSpec((tile, tile), lambda i, k: (i, k)),
                pl.BlockSpec((n_pad, c_h), lambda i, k: (0, 0))]   # H resident
    operands = [adj, h]
    if project:
        in_specs.append(pl.BlockSpec(w.shape, lambda i, k: (0, 0)))
        operands.append(w)
    in_specs.append(pl.BlockSpec((1, c_out), lambda i, k: (0, 0)))
    operands.append(b)
    return pl.pallas_call(
        kernel,
        out_shape=jax.ShapeDtypeStruct((n_pad, c_out), jnp.float32),
        grid_spec=pltpu.PrefetchScalarGridSpec(
            num_scalar_prefetch=0,
            grid=(n_pad // tile, n_pad // tile),
            in_specs=in_specs,
            out_specs=pl.BlockSpec((tile, c_out), lambda i, k: (i, 0)),
            scratch_shapes=[pltpu.VMEM((tile, c_h), jnp.float32)]),
        compiler_params=pltpu.CompilerParams(
            dimension_semantics=("parallel", "arbitrary"),
            vmem_limit_bytes=vmem_limit),
    )(*operands)


def _project_kernel(x_ref, w_ref, o_ref):
    o_ref[...] = jnp.dot(x_ref[...].astype(jnp.bfloat16),
                         w_ref[...].astype(jnp.bfloat16),
                         preferred_element_type=jnp.float32).astype(o_ref.dtype)


def project_rows(x, w, tile, vmem_limit):
    n_pad, c_in = x.shape
    c_out = w.shape[1]
    return pl.pallas_call(
        _project_kernel,
        out_shape=jax.ShapeDtypeStruct((n_pad, c_out), jnp.float32),
        grid_spec=pltpu.PrefetchScalarGridSpec(
            num_scalar_prefetch=0,
            grid=(n_pad // tile,),
            in_specs=[pl.BlockSpec((tile, c_in), lambda i: (i, 0)),
                      pl.BlockSpec((c_in, c_out), lambda i: (0, 0))],
            out_specs=pl.BlockSpec((tile, c_out), lambda i: (i, 0))),
        compiler_params=pltpu.CompilerParams(
            dimension_semantics=("parallel",),
            vmem_limit_bytes=vmem_limit),
    )(x, w)


def _colstats_kernel(x_ref, stats_ref, *, n_real, tm):
    i = pl.program_id(0)

    @pl.when(i == 0)
    def _():
        stats_ref[...] = jnp.zeros_like(stats_ref)

    x = x_ref[...]
    row = i * tm + jax.lax.broadcasted_iota(jnp.int32, x.shape, 0)
    xm = jnp.where(row < n_real, x, 0.0)          # mask zero-padded rows
    s = jnp.sum(xm, axis=0, keepdims=True)
    sq = jnp.sum(xm * xm, axis=0, keepdims=True)
    stats_ref[...] += jnp.concatenate([s, sq], axis=0)


def column_stats(h, n_real, tile, vmem_limit):
    n_pad, c = h.shape
    kernel = functools.partial(_colstats_kernel, n_real=n_real, tm=tile)
    return pl.pallas_call(
        kernel,
        out_shape=jax.ShapeDtypeStruct((2, c), jnp.float32),
        grid_spec=pltpu.PrefetchScalarGridSpec(
            num_scalar_prefetch=0,
            grid=(n_pad // tile,),
            in_specs=[pl.BlockSpec((tile, c), lambda i: (i, 0))],
            out_specs=pl.BlockSpec((2, c), lambda i: (0, 0))),
        compiler_params=pltpu.CompilerParams(
            dimension_semantics=("arbitrary",),
            vmem_limit_bytes=vmem_limit),
    )(h)


def _apply_norm_kernel(x_ref, stats_ref, o_ref, *, n_real, c_real, extra_scale):
    stats = stats_ref[...]
    mean = stats[0:1, :] * (1.0 / float(n_real))
    var = (stats[1:2, :] - float(n_real) * mean * mean) * (1.0 / float(n_real - 1))
    lane = jax.lax.broadcasted_iota(jnp.int32, var.shape, 1)
    var = jnp.where(lane < c_real, jnp.maximum(var, 0.0), 1.0)  # guard pad lanes
    inv_std = jax.lax.rsqrt(var) * jnp.float32(extra_scale)
    o_ref[...] = ((x_ref[...] - mean) * inv_std).astype(o_ref.dtype)


def apply_norm(h, stats, n_real, c_real, extra_scale, tile, vmem_limit):
    n_pad, c = h.shape
    kernel = functools.partial(_apply_norm_kernel, n_real=n_real,
                               c_real=c_real, extra_scale=extra_scale)
    return pl.pallas_call(
        kernel,
        out_shape=jax.ShapeDtypeStruct((n_pad, c), jnp.float32),
        grid_spec=pltpu.PrefetchScalarGridSpec(
            num_scalar_prefetch=0,
            grid=(n_pad // tile,),
            in_specs=[pl.BlockSpec((tile, c), lambda i: (i, 0)),
                      pl.BlockSpec((2, c), lambda i: (0, 0))],
            out_specs=pl.BlockSpec((tile, c), lambda i: (i, 0))),
        compiler_params=pltpu.CompilerParams(
            dimension_semantics=("parallel",),
            vmem_limit_bytes=vmem_limit),
    )(h, stats)


def gcn_stack_tiled(params, adj, x, extra_scale, tile=512):
    """Large-N path. adj: (N,N) bf16, x: (N,C_in) f32 -> (N, C_out) f32."""
    n = adj.shape[0]
    n_pad = _round_up(n, tile)
    if n_pad != n:
        adj = jnp.pad(adj, ((0, n_pad - n), (0, n_pad - n)))
        x = jnp.pad(x, ((0, n_pad - n), (0, 0)))
    vmem_limit = int(min(_vmem_budget_bytes(), 64 << 20))

    h = x
    n_layers = len(params)
    for idx, (w, b) in enumerate(params):
        act = idx < n_layers - 1
        c_in, c_out = w.shape
        c_h = h.shape[1]                     # current (possibly padded) width
        c_out_pad = _round_up(c_out, 128)    # lane-dense stored width
        # Pad W rows to the padded input width (zero rows ignore pad columns of
        # h, which hold sigmoid(0)=0.5 after hidden layers) and cols/bias to a
        # multiple of 128 so stores are unmasked full-lane vst.
        w_p = jnp.pad(w, ((0, c_h - c_in), (0, c_out_pad - c_out)))
        b_p = jnp.pad(b, ((0, 0), (0, c_out_pad - c_out)))
        if c_in <= c_out:
            # Aggregate at the narrow width, project + bias + act in finalize.
            h = agg_project(adj, h, w_p, b_p, act, tile, vmem_limit)
        else:
            # Project first, then aggregate (bias + act in finalize).
            hw = project_rows(h, w_p, tile, vmem_limit)
            h = agg_project(adj, hw, None, b_p, act, tile, vmem_limit)

    c_out_real = params[-1][0].shape[1]
    stats = column_stats(h, n, tile, vmem_limit)
    z = apply_norm(h, stats, n, c_out_real, extra_scale, tile, vmem_limit)
    return z[:n, :c_out_real]


# ----------------------------------------------------------------------------
# Plain-JAX glue (graph preprocessing, augmentation, parameter init)
# ----------------------------------------------------------------------------
def build_norm_adj(edge_index, edge_weight, num_nodes, out_dtype=jnp.bfloat16):
    """Dense D^{-1/2}(A + I)D^{-1/2}; A[dst, src] accumulates edge weights."""
    # TODO(synk): for very large sparse graphs, replace this dense build with a
    # scalar-prefetch gather/segment-sum aggregation kernel (O(E*C), no N^2).
    src = edge_index[0]
    dst = edge_index[1]
    a = jnp.zeros((num_nodes, num_nodes), jnp.float32)
    a = a.at[dst, src].add(edge_weight.astype(jnp.float32))
    a = a + jnp.eye(num_nodes, dtype=jnp.float32)      # self loops
    deg = jnp.sum(a, axis=1)
    deg_inv_sqrt = jnp.where(deg > 0, jax.lax.rsqrt(deg), 0.0)
    return (deg_inv_sqrt[:, None] * a * deg_inv_sqrt[None, :]).astype(out_dtype)


def init_params(channel_lst, key):
    params = []
    for (in_ch, out_ch) in channel_lst:
        key, kw = jax.random.split(key)
        scale = math.sqrt(6.0 / (in_ch + out_ch))       # Glorot uniform
        w = jax.random.uniform(kw, (in_ch, out_ch), jnp.float32, -scale, scale)
        b = jnp.zeros((1, out_ch), jnp.float32)
        params.append((w, b))
    return params


def augment(x, edge_index, pe, pf, key):
    # torch.bernoulli masks reproduced with jax.random (same distribution,
    # not bit-identical to torch's RNG).
    ke, kf = jax.random.split(key)
    edge_keep = jax.random.bernoulli(
        ke, 1.0 - pe, (edge_index.shape[1],)).astype(jnp.float32)
    feat_mask = jax.random.bernoulli(kf, 1.0 - pf, x.shape).astype(x.dtype)
    return x * feat_mask, edge_keep


def cca_homo_forward_train(params, x, edge_index, key,
                           aug_pe1=0.5, aug_pf1=0.5, aug_pe2=0.5, aug_pf2=0.5):
    n = x.shape[0]
    k1, k2 = jax.random.split(key)
    x1, ew1 = augment(x, edge_index, aug_pe1, aug_pf1, k1)
    x2, ew2 = augment(x, edge_index, aug_pe2, aug_pf2, k2)
    inv_sqrt_n = 1.0 / math.sqrt(float(n))
    if n <= fused_max_nodes(params, x.shape[1]):
        # Batched adjacency build (vmap over stacked edge weights) -> bf16
        # (2,N,N) produced directly, no separate jnp.stack copy of N^2 arrays.
        adj_stack = jax.vmap(
            lambda ew: build_norm_adj(edge_index, ew, n))(jnp.stack([ew1, ew2]))
        z = gcn_stack_fused_norm(params, adj_stack,
                                 jnp.stack([x1, x2]), extra_scale=inv_sqrt_n)
        return z[0], z[1]
    z1 = gcn_stack_tiled(params, build_norm_adj(edge_index, ew1, n), x1, inv_sqrt_n)
    z2 = gcn_stack_tiled(params, build_norm_adj(edge_index, ew2, n), x2, inv_sqrt_n)
    return z1, z2


def cca_homo_forward_eval(params, x, edge_index):
    n = x.shape[0]
    adj = build_norm_adj(edge_index, jnp.ones((edge_index.shape[1],), jnp.float32), n)
    if n <= fused_max_nodes(params, x.shape[1]):
        z = gcn_stack_fused_norm(params, adj[None], x[None], extra_scale=1.0)
        return z[0]
    return gcn_stack_tiled(params, adj, x, 1.0)


# ----------------------------------------------------------------------------
if __name__ == "__main__":
    key = jax.random.PRNGKey(0)
    k_feat, k_edge, k_param, k_aug, k_feat2, k_edge2 = jax.random.split(key, 6)

    num_nodes = 24
    num_edges = 64
    channel_lst = [(16, 32), (32, 8)]   # two GCN layers: 16->32 (sigmoid), 32->8

    x = jax.random.normal(k_feat, (num_nodes, 16), jnp.float32)
    edge_index = jax.random.randint(k_edge, (2, num_edges), 0, num_nodes, jnp.int32)
    params = init_params(channel_lst, k_param)

    # Training branch: both augmented views run in ONE fused pallas_call
    # (view axis "parallel" -> one view per TensorCore on v7x).
    z1, z2 = cca_homo_forward_train(params, x, edge_index, k_aug)
    z1 = jax.block_until_ready(z1)
    z2 = jax.block_until_ready(z2)

    # Eval branch (single normalized embedding, same fused kernel, 1 view).
    z_eval = jax.block_until_ready(cca_homo_forward_eval(params, x, edge_index))

    assert z1.shape == (num_nodes, 8) and z2.shape == (num_nodes, 8)
    assert z_eval.shape == (num_nodes, 8)
    assert bool(jnp.all(jnp.isfinite(z1))) and bool(jnp.all(jnp.isfinite(z2)))
    assert bool(jnp.all(jnp.isfinite(z_eval)))

    # Smoke-test the tiled large-N path (used automatically when N exceeds the
    # generation-aware fused cutoff). 640 nodes -> padded to 1024, 2x2 grid,
    # exercises k-accumulation, row masking in the column stats, and padding.
    n_big = 640
    x_big = jax.random.normal(k_feat2, (n_big, 16), jnp.float32)
    edge_big = jax.random.randint(k_edge2, (2, 4096), 0, n_big, jnp.int32)
    adj_big = build_norm_adj(edge_big, jnp.ones((edge_big.shape[1],), jnp.float32), n_big)
    z_big = jax.block_until_ready(gcn_stack_tiled(params, adj_big, x_big, 1.0))
    assert z_big.shape == (n_big, 8)
    assert bool(jnp.all(jnp.isfinite(z_big)))

    print("KERNEL_OK")
</pallas_src>

<mosaic_0001>
module attributes {stable_mosaic.version = 11 : i64} {
  func.func @_fused_stack_kernel(%arg0: i32, %arg1: memref<1x24x24xbf16, #tpu.memory_space<vmem>>, %arg2: memref<1x24x16xf32, #tpu.memory_space<vmem>>, %arg3: memref<16x32xf32, #tpu.memory_space<vmem>>, %arg4: memref<1x32xf32, #tpu.memory_space<vmem>>, %arg5: memref<32x128xf32, #tpu.memory_space<vmem>>, %arg6: memref<1x128xf32, #tpu.memory_space<vmem>>, %arg7: memref<1x24x128xf32, #tpu.memory_space<vmem>>) attributes {dimension_semantics = [#tpu.dimension_semantics<parallel>], iteration_bounds = array<i64: 2>, scalar_prefetch = 0 : i64, scratch_operands = 0 : i64, tpu.core_type = #tpu.core_type<tc>, window_params = [{transform_indices = @transform_0, window_bounds = array<i64: 1, 24, 24>}, {transform_indices = @transform_1, window_bounds = array<i64: 1, 24, 16>}, {pipeline_mode = #tpu.pipeline_mode<synchronous>, transform_indices = @transform_2, window_bounds = array<i64: 16, 32>}, {pipeline_mode = #tpu.pipeline_mode<synchronous>, transform_indices = @transform_3, window_bounds = array<i64: 1, 32>}, {pipeline_mode = #tpu.pipeline_mode<synchronous>, transform_indices = @transform_4, window_bounds = array<i64: 32, 128>}, {pipeline_mode = #tpu.pipeline_mode<synchronous>, transform_indices = @transform_5, window_bounds = array<i64: 1, 128>}, {transform_indices = @transform_6, window_bounds = array<i64: 1, 24, 128>}]} {
    %c0 = arith.constant 0 : index
    %c0_0 = arith.constant 0 : index
    %c0_1 = arith.constant 0 : index
    %0 = vector.load %arg1[%c0, %c0_0, %c0_1] : memref<1x24x24xbf16, #tpu.memory_space<vmem>>, vector<1x24x24xbf16>
    %1 = vector.shape_cast %0 : vector<1x24x24xbf16> to vector<24x24xbf16>
    %c0_2 = arith.constant 0 : index
    %c0_3 = arith.constant 0 : index
    %c0_4 = arith.constant 0 : index
    %2 = vector.load %arg2[%c0_2, %c0_3, %c0_4] : memref<1x24x16xf32, #tpu.memory_space<vmem>>, vector<1x24x16xf32>
    %3 = vector.shape_cast %2 : vector<1x24x16xf32> to vector<24x16xf32>
    %4 = arith.truncf %3 : vector<24x16xf32> to vector<24x16xbf16>
    %c0_5 = arith.constant 0 : index
    %c0_6 = arith.constant 0 : index
    %5 = vector.load %arg3[%c0_5, %c0_6] : memref<16x32xf32, #tpu.memory_space<vmem>>, vector<16x32xf32>
    %6 = arith.truncf %5 : vector<16x32xf32> to vector<16x32xbf16>
    %cst = arith.constant dense<0.000000e+00> : vector<24x16xf32>
    %7 = tpu.matmul %1, %4, %cst {dimension_numbers = #tpu.dot_dimension_numbers<[1], [0], [0], [1], [0, 0, 1, 1], [], []>} : vector<24x24xbf16>, vector<24x16xbf16>, vector<24x16xf32> -> vector<24x16xf32>
    %8 = arith.truncf %7 : vector<24x16xf32> to vector<24x16xbf16>
    %cst_7 = arith.constant dense<0.000000e+00> : vector<24x32xf32>
    %9 = tpu.matmul %8, %6, %cst_7 {dimension_numbers = #tpu.dot_dimension_numbers<[1], [0], [0], [1], [0, 0, 1, 1], [], []>} : vector<24x16xbf16>, vector<16x32xbf16>, vector<24x32xf32> -> vector<24x32xf32>
    %c0_8 = arith.constant 0 : index
    %c0_9 = arith.constant 0 : index
    %10 = vector.load %arg4[%c0_8, %c0_9] : memref<1x32xf32, #tpu.memory_space<vmem>>, vector<1x32xf32>
    %11 = vector.broadcast %10 : vector<1x32xf32> to vector<24x32xf32>
    %12 = arith.addf %9, %11 : vector<24x32xf32>
    %13 = arith.negf %12 : vector<24x32xf32>
    %14 = math.exp %13 : vector<24x32xf32>
    %cst_10 = arith.constant 1.000000e+00 : f32
    %15 = vector.broadcast %cst_10 : f32 to vector<24x32xf32>
    %16 = arith.addf %15, %14 : vector<24x32xf32>
    %17 = arith.divf %15, %16 : vector<24x32xf32>
    %18 = arith.truncf %17 : vector<24x32xf32> to vector<24x32xbf16>
    %c0_11 = arith.constant 0 : index
    %c0_12 = arith.constant 0 : index
    %19 = vector.load %arg5[%c0_11, %c0_12] : memref<32x128xf32, #tpu.memory_space<vmem>>, vector<32x128xf32>
    %20 = arith.truncf %19 : vector<32x128xf32> to vector<32x128xbf16>
    %cst_13 = arith.constant dense<0.000000e+00> : vector<24x32xf32>
    %21 = tpu.matmul %1, %18, %cst_13 {dimension_numbers = #tpu.dot_dimension_numbers<[1], [0], [0], [1], [0, 0, 1, 1], [], []>} : vector<24x24xbf16>, vector<24x32xbf16>, vector<24x32xf32> -> vector<24x32xf32>
    %22 = arith.truncf %21 : vector<24x32xf32> to vector<24x32xbf16>
    %cst_14 = arith.constant dense<0.000000e+00> : vector<24x128xf32>
    %23 = tpu.matmul %22, %20, %cst_14 {dimension_numbers = #tpu.dot_dimension_numbers<[1], [0], [0], [1], [0, 0, 1, 1], [], []>} : vector<24x32xbf16>, vector<32x128xbf16>, vector<24x128xf32> -> vector<24x128xf32>
    %c0_15 = arith.constant 0 : index
    %c0_16 = arith.constant 0 : index
    %24 = vector.load %arg6[%c0_15, %c0_16] : memref<1x128xf32, #tpu.memory_space<vmem>>, vector<1x128xf32>
    %25 = vector.broadcast %24 : vector<1x128xf32> to vector<24x128xf32>
    %26 = arith.addf %23, %25 : vector<24x128xf32>
    %cst_17 = arith.constant dense<0.000000e+00> : vector<128xf32>
    %27 = vector.multi_reduction <add>, %26, %cst_17 [0] : vector<24x128xf32> to vector<128xf32>
    %28 = vector.shape_cast %27 : vector<128xf32> to vector<1x128xf32>
    %cst_18 = arith.constant 2.400000e+01 : f32
    %29 = vector.broadcast %cst_18 : f32 to vector<1x128xf32>
    %30 = arith.divf %28, %29 : vector<1x128xf32>
    %31 = vector.broadcast %30 : vector<1x128xf32> to vector<24x128xf32>
    %32 = arith.subf %26, %31 : vector<24x128xf32>
    %33 = arith.mulf %32, %32 : vector<24x128xf32>
    %cst_19 = arith.constant dense<0.000000e+00> : vector<128xf32>
    %34 = vector.multi_reduction <add>, %33, %cst_19 [0] : vector<24x128xf32> to vector<128xf32>
    %35 = vector.shape_cast %34 : vector<128xf32> to vector<1x128xf32>
    %cst_20 = arith.constant 0.0434782617 : f32
    %36 = vector.broadcast %cst_20 : f32 to vector<1x128xf32>
    %37 = arith.mulf %35, %36 : vector<1x128xf32>
    %38 = tpu.iota {dimensions = array<i32: 1>} : vector<1x128xi32>
    %c8_i32 = arith.constant 8 : i32
    %39 = vector.broadcast %c8_i32 : i32 to vector<1x128xi32>
    %40 = arith.cmpi slt, %38, %39 : vector<1x128xi32>
    %cst_21 = arith.constant 1.000000e+00 : f32
    %41 = vector.broadcast %cst_21 : f32 to vector<1x128xf32>
    %42 = arith.select %40, %37, %41 : vector<1x128xi1>, vector<1x128xf32>
    %43 = math.rsqrt %42 : vector<1x128xf32>
    %cst_22 = arith.constant 0.204124153 : f32
    %44 = vector.broadcast %cst_22 : f32 to vector<1x128xf32>
    %45 = arith.mulf %43, %44 : vector<1x128xf32>
    %46 = vector.broadcast %45 : vector<1x128xf32> to vector<24x128xf32>
    %47 = arith.mulf %32, %46 : vector<24x128xf32>
    %c0_23 = arith.constant 0 : index
    %c0_24 = arith.constant 0 : index
    %c0_25 = arith.constant 0 : index
    %48 = vector.load %arg7[%c0_23, %c0_24, %c0_25] : memref<1x24x128xf32, #tpu.memory_space<vmem>>, vector<1x24x128xf32>
    %49 = vector.shape_cast %48 : vector<1x24x128xf32> to vector<24x128xf32>
    %50 = vector.shape_cast %47 : vector<24x128xf32> to vector<1x24x128xf32>
    tpu.vector_store %arg7[%c0_23, %c0_24, %c0_25], %50 {strides = array<i32>} : memref<1x24x128xf32, #tpu.memory_space<vmem>>, vector<1x24x128xf32>,
    return
  }
  func.func @transform_0(%arg0: i32) -> (i32, i32, i32) {
    %c0_i32 = arith.constant 0 : i32
    %c0_i32_0 = arith.constant 0 : i32
    %c0_i32_1 = arith.constant 0 : i32
    return %arg0, %c0_i32, %c0_i32_0 : i32, i32, i32
  }
  func.func @transform_1(%arg0: i32) -> (i32, i32, i32) {
    %c0_i32 = arith.constant 0 : i32
    %c0_i32_0 = arith.constant 0 : i32
    %c0_i32_1 = arith.constant 0 : i32
    return %arg0, %c0_i32, %c0_i32_0 : i32, i32, i32
  }
  func.func @transform_2(%arg0: i32) -> (i32, i32) {
    %c0_i32 = arith.constant 0 : i32
    %c0_i32_0 = arith.constant 0 : i32
    %c0_i32_1 = arith.constant 0 : i32
    return %c0_i32, %c0_i32_0 : i32, i32
  }
  func.func @transform_3(%arg0: i32) -> (i32, i32) {
    %c0_i32 = arith.constant 0 : i32
    %c0_i32_0 = arith.constant 0 : i32
    %c0_i32_1 = arith.constant 0 : i32
    return %c0_i32, %c0_i32_0 : i32, i32
  }
  func.func @transform_4(%arg0: i32) -> (i32, i32) {
    %c0_i32 = arith.constant 0 : i32
    %c0_i32_0 = arith.constant 0 : i32
    %c0_i32_1 = arith.constant 0 : i32
    return %c0_i32, %c0_i32_0 : i32, i32
  }
  func.func @transform_5(%arg0: i32) -> (i32, i32) {
    %c0_i32 = arith.constant 0 : i32
    %c0_i32_0 = arith.constant 0 : i32
    %c0_i32_1 = arith.constant 0 : i32
    return %c0_i32, %c0_i32_0 : i32, i32
  }
  func.func @transform_6(%arg0: i32) -> (i32, i32, i32) {
    %c0_i32 = arith.constant 0 : i32
    %c0_i32_0 = arith.constant 0 : i32
    %c0_i32_1 = arith.constant 0 : i32
    return %arg0, %c0_i32, %c0_i32_0 : i32, i32, i32
  }
}

</mosaic_0001>

<llo_original>
// kernel: tpu_custom_call.1
$region0: #{tpu_custom_call.1}
  #allocation0 [shape = 'u32[]', space=smem, size = 0x4, offset = 0x4, fixed_abs, tag = 'smem constant byte address 0x4 - core index']
  #allocation1 [shape = 'u32[144,128]{1,0:T(1,128)}', space=vmem, size = 0x12000, scoped, tag = 'internal scratch']
  %s0 = inlined_call_operand.vmem [shape: bf16[2,24,24], index: 0, kind: input, shape index: {}]
  %s1 = inlined_call_operand.vmem [shape: f32[2,24,16], index: 1, kind: input, shape index: {}]
  %s2 = inlined_call_operand.vmem [shape: f32[16,32], index: 2, kind: input, shape index: {}]
  %s3 = inlined_call_operand.vmem [shape: f32[1,32], index: 3, kind: input, shape index: {}]
  %s4 = inlined_call_operand.vmem [shape: f32[32,128], index: 4, kind: input, shape index: {}]
  %s5 = inlined_call_operand.vmem [shape: f32[1,128], index: 5, kind: input, shape index: {}]
  %s6 = inlined_call_operand.hbm [shape: f32[2,24,128], index: 6, kind: output, shape index: {}]
  %s7 = sld [smem:[#allocation0]]
  $region57: #{tpu_custom_call.1} parent=0
    _
  %s9 = ssub.s32 1, %s7
  %s10 = scalar_select 0, %s9, %s7
  $region1: #{tpu_custom_call.1} parent=0
    #allocation2 [shape = 'u8[24576]{0}', space=vmem, size = 0x6000, scoped, tag = 'output window, operand 0']
    #allocation3 [shape = 's32[2]{0}', space=sflag, size = 0x8, scoped, tag = 'scoped memory for tpu_custom_call.1']
    %11 = vsyncpa [#allocation3], 0
    %s12 = scalar_lea.sflag [#allocation3], 1
    %13 = vsyncpa %s12, 0
    loop: start=0, step=1, limit=4
    $region2: #{tpu_custom_call.1} parent=1 // loop_pre_header
      _
    $region3: #{tpu_custom_call.1} parent=1 // loop_header
      %s15 = sphi 0, %s19
      %p16 = scmp.ge.s32.totalorder %s15, 4
      %s25 = sphi 0, %s27
      %s28 = sphi 0, %s25
      %s29 = sphi 0, %s28
      %s45 = sphi 0, %s29
      %s51 = sphi 0, %s53
      %s54 = sphi 0, %s51
      %s55 = sphi 0, %s54
      %s71 = sphi 0, %s55
      %s75 = sphi 0, %s75
      %s77 = sphi 0, %s75
      %s78 = sphi 0, %s77
      %s92 = sphi 0, %s78
      %s96 = sphi 0, %s96
      %s98 = sphi 0, %s96
      %s99 = sphi 0, %s98
      %s113 = sphi 0, %s99
      %s117 = sphi 0, %s117
      %s119 = sphi 0, %s117
      %s120 = sphi 0, %s119
      %s134 = sphi 0, %s120
      %s138 = sphi 0, %s138
      %s140 = sphi 0, %s138
      %s141 = sphi 0, %s140
      %s155 = sphi 0, %s141
      %s161 = sphi 0, %s163
      %s164 = sphi 0, %s161
      %s165 = sphi 0, %s164
      %s181 = sphi 0, %s165
    $region4: #{tpu_custom_call.1} parent=1 // loop_header_branch
      %18 = sbr.rel (%p16) target = $region8
    $region5: #{tpu_custom_call.1} parent=1 // loop_body
      %s20 = ssub.s32 %s15, 1
      %s21 = ssub.s32 %s15, 2
      %s22 = sadd.s32 %s15, 1
      %s23 = ssub.s32 %s15, %s22
      %p24 = scmp.eq.s32.totalorder %s23, 0
      %s26 = sadd.s32 %s25, 1
      %s27 = scalar_select %p24, %s25, %s26
      %p30 = pneg %p24
      %p31 = scmp.eq.s32.totalorder %s15, 1
      %p32 = por %p30, %p31
      %p33 = scmp.ne.s32.totalorder %s25, %s28
      %p34 = scmp.eq.s32.totalorder %s15, 0
      %p35 = por %p33, %p34
      %p36 = scmp.ne.s32.totalorder %s25, %s28
      %p37 = scmp.eq.s32.totalorder %s20, 1
      %p38 = por %p36, %p37
      %p39 = scmp.ne.s32.totalorder %s28, %s29
      %p40 = scmp.eq.s32.totalorder %s20, 0
      %p41 = por %p39, %p40
      %p42 = scmp.ne.s32.totalorder %s28, %s29
      %p43 = scmp.eq.s32.totalorder %s21, 1
      %p44 = por %p42, %p43
      %p46 = scmp.ne.s32.totalorder %s29, %s45
      %p47 = scmp.eq.s32.totalorder %s21, 0
      %p48 = por %p46, %p47
      %s49 = ssub.s32 %s15, %s22
      %p50 = scmp.eq.s32.totalorder %s49, 0
      %s52 = sadd.s32 %s51, 1
      %s53 = scalar_select %p50, %s51, %s52
      %p56 = pneg %p50
      %p57 = scmp.eq.s32.totalorder %s15, 1
      %p58 = por %p56, %p57
      %p59 = scmp.ne.s32.totalorder %s51, %s54
      %p60 = scmp.eq.s32.totalorder %s15, 0
      %p61 = por %p59, %p60
      %p62 = scmp.ne.s32.totalorder %s51, %s54
      %p63 = scmp.eq.s32.totalorder %s20, 1
      %p64 = por %p62, %p63
      %p65 = scmp.ne.s32.totalorder %s54, %s55
      %p66 = scmp.eq.s32.totalorder %s20, 0
      %p67 = por %p65, %p66
      %p68 = scmp.ne.s32.totalorder %s54, %s55
      %p69 = scmp.eq.s32.totalorder %s21, 1
      %p70 = por %p68, %p69
      %p72 = scmp.ne.s32.totalorder %s55, %s71
      %p73 = scmp.eq.s32.totalorder %s21, 0
      %p74 = por %p72, %p73
      %s76 = sadd.s32 %s75, 1
      %p79 = scmp.eq.s32.totalorder %s15, 1
      %p80 = scmp.ne.s32.totalorder %s75, %s77
      %p81 = scmp.eq.s32.totalorder %s15, 0
      %p82 = por %p80, %p81
      %p83 = scmp.ne.s32.totalorder %s75, %s77
      %p84 = scmp.eq.s32.totalorder %s20, 1
      %p85 = por %p83, %p84
      %p86 = scmp.ne.s32.totalorder %s77, %s78
      %p87 = scmp.eq.s32.totalorder %s20, 0
      %p88 = por %p86, %p87
      %p89 = scmp.ne.s32.totalorder %s77, %s78
      %p90 = scmp.eq.s32.totalorder %s21, 1
      %p91 = por %p89, %p90
      %p93 = scmp.ne.s32.totalorder %s78, %s92
      %p94 = scmp.eq.s32.totalorder %s21, 0
      %p95 = por %p93, %p94
      %s97 = sadd.s32 %s96, 1
      %p100 = scmp.eq.s32.totalorder %s15, 1
      %p101 = scmp.ne.s32.totalorder %s96, %s98
      %p102 = scmp.eq.s32.totalorder %s15, 0
      %p103 = por %p101, %p102
      %p104 = scmp.ne.s32.totalorder %s96, %s98
      %p105 = scmp.eq.s32.totalorder %s20, 1
      %p106 = por %p104, %p105
      %p107 = scmp.ne.s32.totalorder %s98, %s99
      %p108 = scmp.eq.s32.totalorder %s20, 0
      %p109 = por %p107, %p108
      %p110 = scmp.ne.s32.totalorder %s98, %s99
      %p111 = scmp.eq.s32.totalorder %s21, 1
      %p112 = por %p110, %p111
      %p114 = scmp.ne.s32.totalorder %s99, %s113
      %p115 = scmp.eq.s32.totalorder %s21, 0
      %p116 = por %p114, %p115
      %s118 = sadd.s32 %s117, 1
      %p121 = scmp.eq.s32.totalorder %s15, 1
      %p122 = scmp.ne.s32.totalorder %s117, %s119
      %p123 = scmp.eq.s32.totalorder %s15, 0
      %p124 = por %p122, %p123
      %p125 = scmp.ne.s32.totalorder %s117, %s119
      %p126 = scmp.eq.s32.totalorder %s20, 1
      %p127 = por %p125, %p126
      %p128 = scmp.ne.s32.totalorder %s119, %s120
      %p129 = scmp.eq.s32.totalorder %s20, 0
      %p130 = por %p128, %p129
      %p131 = scmp.ne.s32.totalorder %s119, %s120
      %p132 = scmp.eq.s32.totalorder %s21, 1
      %p133 = por %p131, %p132
      %p135 = scmp.ne.s32.totalorder %s120, %s134
      %p136 = scmp.eq.s32.totalorder %s21, 0
      %p137 = por %p135, %p136
      %s139 = sadd.s32 %s138, 1
      %p142 = scmp.eq.s32.totalorder %s15, 1
      %p143 = scmp.ne.s32.totalorder %s138, %s140
      %p144 = scmp.eq.s32.totalorder %s15, 0
      %p145 = por %p143, %p144
      %p146 = scmp.ne.s32.totalorder %s138, %s140
      %p147 = scmp.eq.s32.totalorder %s20, 1
      %p148 = por %p146, %p147
      %p149 = scmp.ne.s32.totalorder %s140, %s141
      %p150 = scmp.eq.s32.totalorder %s20, 0
      %p151 = por %p149, %p150
      %p152 = scmp.ne.s32.totalorder %s140, %s141
      %p153 = scmp.eq.s32.totalorder %s21, 1
      %p154 = por %p152, %p153
      %p156 = scmp.ne.s32.totalorder %s141, %s155
      %p157 = scmp.eq.s32.totalorder %s21, 0
      %p158 = por %p156, %p157
      %s159 = ssub.s32 %s15, %s22
      %p160 = scmp.eq.s32.totalorder %s159, 0
      %s162 = sadd.s32 %s161, 1
      %s163 = scalar_select %p160, %s161, %s162
      %p166 = pneg %p160
      %p167 = scmp.eq.s32.totalorder %s15, 1
      %p168 = por %p166, %p167
      %p169 = scmp.ne.s32.totalorder %s161, %s164
      %p170 = scmp.eq.s32.totalorder %s15, 0
      %p171 = por %p169, %p170
      %p172 = scmp.ne.s32.totalorder %s161, %s164
      %p173 = scmp.eq.s32.totalorder %s20, 1
      %p174 = por %p172, %p173
      %p175 = scmp.ne.s32.totalorder %s164, %s165
      %p176 = scmp.eq.s32.totalorder %s20, 0
      %p177 = por %p175, %p176
      %p178 = scmp.ne.s32.totalorder %s164, %s165
      %p179 = scmp.eq.s32.totalorder %s21, 1
      %p180 = por %p178, %p179
      %p182 = scmp.ne.s32.totalorder %s165, %s181
      %p183 = scmp.eq.s32.totalorder %s21, 0
      %p184 = por %p182, %p183
      %p185 = scmp.le.s32.totalorder 1, %s15
      %p186 = scmp.lt.s32.totalorder %s15, 3
      %p187 = pnand %p185, %p186
      %p188 = pneg %p187
      // Predicated region
      $region9: #{tpu_custom_call.1} parent=5 // pred_check
        _
      $region10: #{tpu_custom_call.1} parent=5 // pred_check_branch
        %190 = sbr.rel (%p187) target = $region12
      $region11: #{tpu_custom_call.1} parent=5 // pred_region
        %s191 = ssub.s32 %s15, 1
        // Predicated region
        $region13: #{tpu_custom_call.1} parent=11 // pred_check
          %p192 = pneg %p88
        $region14: #{tpu_custom_call.1} parent=11 // pred_check_branch
          %194 = sbr.rel (%p192) target = $region16
        $region15: #{tpu_custom_call.1} parent=11 // pred_region
          _
        $region16: #{tpu_custom_call.1} parent=11 // pred_fallthru
          _
        // Predicated region
        $region17: #{tpu_custom_call.1} parent=11 // pred_check
          %p195 = pneg %p109
        $region18: #{tpu_custom_call.1} parent=11 // pred_check_branch
          %197 = sbr.rel (%p195) target = $region20
        $region19: #{tpu_custom_call.1} parent=11 // pred_region
          _
        $region20: #{tpu_custom_call.1} parent=11 // pred_fallthru
          _
        // Predicated region
        $region21: #{tpu_custom_call.1} parent=11 // pred_check
          %p198 = pneg %p130
        $region22: #{tpu_custom_call.1} parent=11 // pred_check_branch
          %200 = sbr.rel (%p198) target = $region24
        $region23: #{tpu_custom_call.1} parent=11 // pred_region
          _
        $region24: #{tpu_custom_call.1} parent=11 // pred_fallthru
          _
        // Predicated region
        $region25: #{tpu_custom_call.1} parent=11 // pred_check
          %p201 = pneg %p151
        $region26: #{tpu_custom_call.1} parent=11 // pred_check_branch
          %203 = sbr.rel (%p201) target = $region28
        $region27: #{tpu_custom_call.1} parent=11 // pred_region
          _
        $region28: #{tpu_custom_call.1} parent=11 // pred_fallthru
          _
      $region12: #{tpu_custom_call.1} parent=5 // pred_fallthru
        _
      %p204 = scmp.lt.s32.totalorder %s15, 2
      // Predicated region
      $region29: #{tpu_custom_call.1} parent=5 // pred_check
        %p205 = pneg %p204
      $region30: #{tpu_custom_call.1} parent=5 // pred_check_branch
        %207 = sbr.rel (%p205) target = $region32
      $region31: #{tpu_custom_call.1} parent=5 // pred_region
        // Predicated region
        $region33: #{tpu_custom_call.1} parent=31 // pred_check
          %p208 = pneg %p35
        $region34: #{tpu_custom_call.1} parent=31 // pred_check_branch
          %210 = sbr.rel (%p208) target = $region36
        $region35: #{tpu_custom_call.1} parent=31 // pred_region
          %p211 = scmp.lt.s32.totalorder %s15, 1
          %s212 = scalar_select %p211, %s15, 1
          %s213 = smul.addr %s212, 3
          %s214 = smul.addr %s213, 4
          %s215 = scalar_lea.vmem %s0, %s214
        $region36: #{tpu_custom_call.1} parent=31 // pred_fallthru
          _
        // Predicated region
        $region37: #{tpu_custom_call.1} parent=31 // pred_check
          %p216 = pneg %p61
        $region38: #{tpu_custom_call.1} parent=31 // pred_check_branch
          %218 = sbr.rel (%p216) target = $region40
        $region39: #{tpu_custom_call.1} parent=31 // pred_region
          %p219 = scmp.lt.s32.totalorder %s15, 1
          %s220 = scalar_select %p219, %s15, 1
          %s221 = smul.addr %s220, 3
          %s222 = smul.addr %s221, 8
          %s223 = scalar_lea.vmem %s1, %s222
        $region40: #{tpu_custom_call.1} parent=31 // pred_fallthru
          _
      $region32: #{tpu_custom_call.1} parent=5 // pred_fallthru
        _
      %p224 = scmp.le.s32.totalorder 1, %s15
      %p225 = scmp.lt.s32.totalorder %s15, 3
      %p226 = pnand %p224, %p225
      %p227 = pneg %p226
      // Predicated region
      $region41: #{tpu_custom_call.1} parent=5 // pred_check
        _
      $region42: #{tpu_custom_call.1} parent=5 // pred_check_branch
        %229 = sbr.rel (%p226) target = $region44
      $region43: #{tpu_custom_call.1} parent=5 // pred_region
        %s230 = ssub.s32 %s15, 1
        %p231 = scmp.lt.s32.totalorder %s20, 1
        %s232 = scalar_select %p231, %s20, 1
        %s233 = smul.addr %s232, 3
        %s234 = smul.addr %s233, 4
        %s235 = scalar_lea.vmem %s0, %s234
        %p236 = pneg %p41
        %p237 = pneg %p38
        %p238 = scmp.lt.s32.totalorder %s20, 1
        %s239 = scalar_select %p238, %s20, 1
        %s240 = smul.addr %s239, 3
        %s241 = smul.addr %s240, 8
        %s242 = scalar_lea.vmem %s1, %s241
        %p243 = pneg %p67
        %p244 = pneg %p64
        %p245 = pneg %p88
        %p246 = pneg %p85
        %p247 = pneg %p109
        %p248 = pneg %p106
        %p249 = pneg %p130
        %p250 = pneg %p127
        %p251 = pneg %p151
        %p252 = pneg %p148
        %p253 = pneg %p177
        %p254 = pneg %p174
        %s255 = sand.u32 %s164, 1
        %s256 = scalar_lea.sflag [#allocation3], %s255
        %s257 = sand.u32 %s164, 1
        %s258 = smul.addr %s257, 24
        %s259 = scalar_lea.vmem [#allocation2], %s258
        %p260 = scmp.lt.s32.totalorder %s20, 1
        %s261 = scalar_select %p260, %s20, 1
        %s262 = smul.addr %s261, 3
        %s263 = smul.addr %s262, 4
        %s264 = scalar_lea.vmem %s0, %s263
        %p265 = scmp.lt.s32.totalorder %s20, 1
        %s266 = scalar_select %p265, %s20, 1
        %s267 = smul.addr %s266, 3
        %s268 = smul.addr %s267, 8
        %s269 = scalar_lea.vmem %s1, %s268
        %v271 = vld [vmem:[%s264] sm:$0xf]
        %v272 = vld [vmem:[%s264 + $0x4] sm:$0xf]
        %v273 = vld [vmem:[%s264 + $0x8] sm:$0xf]
        %v274 = vld [vmem:[%s269] sm:$0xff]
        %v275 = vld [vmem:[%s269 + $0x8] sm:$0xff]
        %v276 = vld [vmem:[%s269 + $0x10] sm:$0xff]
        %v277 = vpack.c.bf16 %v275, %v274
        %v278 = vpack.c.bf16 %v276, %v276
        %v279 = vld [vmem:[%s2] sm:$0xff]
        %v280 = vld [vmem:[%s2 + $0x8] sm:$0xff]
        %v281 = vpack.c.bf16 %v280, %v279
        %v285 = vunpack.c.l.b16 %v271
        %v286 = vunpack.c.l.b16 %v272
        %v287 = vunpack.c.l.b16 %v273
        %v288 = vpack.c.b16 %v286, %v285
        %v289 = vpack.c.b16 %v287, %v287
        %vm290 = vcmask 195584
        %v292 = vsel %vm290, %v288, 0
        %v295 = vsel %vm290, %v289, 0
        %vm297 = vcmask 1043456
        %v299 = vsel %vm297, %v278, 0
        %301 = vmatprep.subr.bf16.mxu0 0
        %302 = vmatpush1.bf16.msra.mxu0 0
        %303 = vmatprep.subr.bf16.mxu0 0
        %304 = vmatpush1.bf16.msra.mxu0 0
        %305 = vmatprep.subr.bf16.mxu0 0
        %306 = vmatpush1.bf16.msra.mxu0 0
        %307 = vmatprep.subr.bf16.mxu0 0
        %308 = vmatpush1.bf16.msra.mxu0 0
        %309 = vmatprep.subr.bf16.mxu0 0
        %310 = vmatpush1.bf16.msra.mxu0 0
        %311 = vmatprep.subr.bf16.mxu0 0
        %312 = vmatpush1.bf16.msra.mxu0 0
        %313 = vmatprep.subr.bf16.mxu0 0
        %314 = vmatpush1.bf16.msra.mxu0 %v299
        %315 = vmatprep.subr.bf16.mxu0 0
        %316 = vmatpush1.bf16.msra.mxu0 %v277
        %317 = vmatprep.subr.bf16.mxu0 0
        %318 = vmatpush2.bf16.msra.mxu0 0
        %319 = vmatprep.subr.bf16.mxu0 0
        %320 = vmatpush2.bf16.msra.mxu0 0
        %321 = vmatprep.subr.bf16.mxu0 0
        %322 = vmatpush2.bf16.msra.mxu0 0
        %323 = vmatprep.subr.bf16.mxu0 0
        %324 = vmatpush2.bf16.msra.mxu0 0
        %325 = vmatprep.subr.bf16.mxu0 0
        %326 = vmatpush2.bf16.msra.mxu0 0
        %327 = vmatprep.subr.bf16.mxu0 0
        %328 = vmatpush2.bf16.msra.mxu0 0
        %329 = vmatprep.subr.bf16.mxu0 0
        %330 = vmatpush2.bf16.msra.mxu0 0
        %331 = vmatprep.subr.bf16.mxu0 0
        %332 = vmatpush2.bf16.msra.mxu0 0
        %333 = vmatprep.mubr.bf16.mxu0 0
        %334 = vmatmul.mubr.bf16.gmra.mxu0 %v292
        %v335 = vpop.f32.mrf.mxu0
        %v336 = vadd.f32 0.0, %v335
        %v337 = vpop.f32.mrf.mxu0
        %v338 = vpop.f32.mrf.mxu0
        %v339 = vadd.f32 0.0, %v338
        %v340 = vpop.f32.mrf.mxu0
        %341 = vmatprep.mubr.bf16.mxu0 0
        %342 = vmatmul.mubr.bf16.gmra.mxu0 %v295
        %v343 = vpop.f32.mrf.mxu0
        %v344 = vadd.f32 0.0, %v343
        %v345 = vpop.f32.mrf.mxu0
        %v346 = vpop.f32.mrf.mxu0
        %v347 = vpop.f32.mrf.mxu0
        %348 = vdwg.mxu0
        %v349 = vpack.c.bf16 %v339, %v336
        %v350 = vpack.c.bf16 %v344, %v344
        %v351 = vld [vmem:[%s3] sm:$0x1]
        %v353 = vlaneseq
        %v354 = vshrl.u32 %v353, 7
        %v355 = vsub.s32 0, %v354
        %v356 = vrot.slane %v351, %v355
        %vm358 = vcmask 130048
        %v360 = vsel %vm358, %v349, 0
        %v363 = vsel %vm358, %v350, 0
        %365 = vmatprep.subr.bf16.mxu0 0
        %366 = vmatpush1.bf16.msra.mxu0 0
        %367 = vmatprep.subr.bf16.mxu0 0
        %368 = vmatpush1.bf16.msra.mxu0 0
        %369 = vmatprep.subr.bf16.mxu0 0
        %370 = vmatpush1.bf16.msra.mxu0 0
        %371 = vmatprep.subr.bf16.mxu0 0
        %372 = vmatpush1.bf16.msra.mxu0 0
        %373 = vmatprep.subr.bf16.mxu0 0
        %374 = vmatpush1.bf16.msra.mxu0 0
        %375 = vmatprep.subr.bf16.mxu0 0
        %376 = vmatpush1.bf16.msra.mxu0 0
        %377 = vmatprep.subr.bf16.mxu0 0
        %378 = vmatpush1.bf16.msra.mxu0 0
        %379 = vmatprep.subr.bf16.mxu0 0
        %380 = vmatpush1.bf16.msra.mxu0 %v281
        %381 = vmatprep.subr.bf16.mxu0 0
        %382 = vmatpush2.bf16.msra.mxu0 0
        %383 = vmatprep.subr.bf16.mxu0 0
        %384 = vmatpush2.bf16.msra.mxu0 0
        %385 = vmatprep.subr.bf16.mxu0 0
        %386 = vmatpush2.bf16.msra.mxu0 0
        %387 = vmatprep.subr.bf16.mxu0 0
        %388 = vmatpush2.bf16.msra.mxu0 0
        %389 = vmatprep.subr.bf16.mxu0 0
        %390 = vmatpush2.bf16.msra.mxu0 0
        %391 = vmatprep.subr.bf16.mxu0 0
        %392 = vmatpush2.bf16.msra.mxu0 0
        %393 = vmatprep.subr.bf16.mxu0 0
        %394 = vmatpush2.bf16.msra.mxu0 0
        %395 = vmatprep.subr.bf16.mxu0 0
        %396 = vmatpush2.bf16.msra.mxu0 0
        %397 = vmatprep.mubr.bf16.mxu0 0
        %398 = vmatmul.mubr.bf16.gmra.mxu0 %v360
        %v399 = vpop.f32.mrf.mxu0
        %v400 = vadd.f32 %v356, %v399
        %v401 = vpop.f32.mrf.mxu0
        %v402 = vpop.f32.mrf.mxu0
        %v403 = vadd.f32 %v356, %v402
        %v404 = vpop.f32.mrf.mxu0
        %405 = vmatprep.mubr.bf16.mxu0 0
        %406 = vmatmul.mubr.bf16.gmra.mxu0 %v363
        %v407 = vpop.f32.mrf.mxu0
        %v408 = vadd.f32 %v356, %v407
        %v409 = vpop.f32.mrf.mxu0
        %v410 = vpop.f32.mrf.mxu0
        %v411 = vpop.f32.mrf.mxu0
        %412 = vdwg.mxu0
        %v413 = vxor.u32 %v400, 2147483648
        %v414 = vxor.u32 %v403, 2147483648
        %v415 = vxor.u32 %v408, 2147483648
        %v416 = vmul.f32 %v413, 1.442695
        %v417 = vpow.pop %v416
        %v418 = vmul.f32 %v414, 1.442695
        %v419 = vpow.pop %v418
        %v420 = vmul.f32 %v415, 1.442695
        %v421 = vpow.pop %v420
        %v422 = vadd.f32 %v417, 1.0
        %v423 = vadd.f32 %v419, 1.0
        %v424 = vadd.f32 %v421, 1.0
        %v425 = vrcp.pop %v422
        %v426 = vmul.f32 1.0, %v425
        %v427 = vrcp.pop %v423
        %v428 = vmul.f32 1.0, %v427
        %v429 = vrcp.pop %v424
        %v430 = vmul.f32 1.0, %v429
        %v431 = vpack.c.bf16 %v428, %v426
        %v432 = vpack.c.bf16 %v430, %v430
        %v433 = vld [vmem:[%s4] sm:$0xff]
        %v434 = vld [vmem:[%s4 + $0x8] sm:$0xff]
        %v435 = vld [vmem:[%s4 + $0x10] sm:$0xff]
        %v436 = vld [vmem:[%s4 + $0x18] sm:$0xff]
        %v437 = vpack.c.bf16 %v434, %v433
        %v438 = vpack.c.bf16 %v436, %v435
        %v440 = vsel %vm297, %v432, 0
        %442 = vmatprep.subr.bf16.mxu0 0
        %443 = vmatpush1.bf16.msra.mxu0 0
        %444 = vmatprep.subr.bf16.mxu0 0
        %445 = vmatpush1.bf16.msra.mxu0 0
        %446 = vmatprep.subr.bf16.mxu0 0
        %447 = vmatpush1.bf16.msra.mxu0 0
        %448 = vmatprep.subr.bf16.mxu0 0
        %449 = vmatpush1.bf16.msra.mxu0 0
        %450 = vmatprep.subr.bf16.mxu0 0
        %451 = vmatpush1.bf16.msra.mxu0 0
        %452 = vmatprep.subr.bf16.mxu0 0
        %453 = vmatpush1.bf16.msra.mxu0 0
        %454 = vmatprep.subr.bf16.mxu0 0
        %455 = vmatpush1.bf16.msra.mxu0 %v440
        %456 = vmatprep.subr.bf16.mxu0 0
        %457 = vmatpush1.bf16.msra.mxu0 %v431
        %458 = vmatprep.subr.bf16.mxu0 0
        %459 = vmatpush2.bf16.msra.mxu0 0
        %460 = vmatprep.subr.bf16.mxu0 0
        %461 = vmatpush2.bf16.msra.mxu0 0
        %462 = vmatprep.subr.bf16.mxu0 0
        %463 = vmatpush2.bf16.msra.mxu0 0
        %464 = vmatprep.subr.bf16.mxu0 0
        %465 = vmatpush2.bf16.msra.mxu0 0
        %466 = vmatprep.subr.bf16.mxu0 0
        %467 = vmatpush2.bf16.msra.mxu0 0
        %468 = vmatprep.subr.bf16.mxu0 0
        %469 = vmatpush2.bf16.msra.mxu0 0
        %470 = vmatprep.subr.bf16.mxu0 0
        %471 = vmatpush2.bf16.msra.mxu0 0
        %472 = vmatprep.subr.bf16.mxu0 0
        %473 = vmatpush2.bf16.msra.mxu0 0
        %474 = vmatprep.mubr.bf16.mxu0 0
        %475 = vmatmul.mubr.bf16.gmra.mxu0 %v292
        %v476 = vpop.f32.mrf.mxu0
        %v477 = vadd.f32 0.0, %v476
        %v478 = vpop.f32.mrf.mxu0
        %v479 = vpop.f32.mrf.mxu0
        %v480 = vadd.f32 0.0, %v479
        %v481 = vpop.f32.mrf.mxu0
        %482 = vmatprep.mubr.bf16.mxu0 0
        %483 = vmatmul.mubr.bf16.gmra.mxu0 %v295
        %v484 = vpop.f32.mrf.mxu0
        %v485 = vadd.f32 0.0, %v484
        %v486 = vpop.f32.mrf.mxu0
        %v487 = vpop.f32.mrf.mxu0
        %v488 = vpop.f32.mrf.mxu0
        %489 = vdwg.mxu0
        %v490 = vpack.c.bf16 %v480, %v477
        %v491 = vpack.c.bf16 %v485, %v485
        %v492 = vld [vmem:[%s5] sm:$0x1]
        %v494 = vlaneseq
        %v495 = vshrl.u32 %v494, 7
        %v496 = vsub.s32 0, %v495
        %v497 = vrot.slane %v492, %v496
        %vm499 = vcmask 261120
        %v501 = vsel %vm499, %v490, 0
        %v504 = vsel %vm499, %v491, 0
        %506 = vmatprep.subr.bf16.mxu0 0
        %507 = vmatpush1.bf16.msra.mxu0 0
        %508 = vmatprep.subr.bf16.mxu0 0
        %509 = vmatpush1.bf16.msra.mxu0 0
        %510 = vmatprep.subr.bf16.mxu0 0
        %511 = vmatpush1.bf16.msra.mxu0 0
        %512 = vmatprep.subr.bf16.mxu0 0
        %513 = vmatpush1.bf16.msra.mxu0 0
        %514 = vmatprep.subr.bf16.mxu0 0
        %515 = vmatpush1.bf16.msra.mxu0 0
        %516 = vmatprep.subr.bf16.mxu0 0
        %517 = vmatpush1.bf16.msra.mxu0 0
        %518 = vmatprep.subr.bf16.mxu0 0
        %519 = vmatpush1.bf16.msra.mxu0 %v438
        %520 = vmatprep.subr.bf16.mxu0 0
        %521 = vmatpush1.bf16.msra.mxu0 %v437
        %522 = vmatprep.subr.bf16.mxu0 0
        %523 = vmatpush2.bf16.msra.mxu0 0
        %524 = vmatprep.subr.bf16.mxu0 0
        %525 = vmatpush2.bf16.msra.mxu0 0
        %526 = vmatprep.subr.bf16.mxu0 0
        %527 = vmatpush2.bf16.msra.mxu0 0
        %528 = vmatprep.subr.bf16.mxu0 0
        %529 = vmatpush2.bf16.msra.mxu0 0
        %530 = vmatprep.subr.bf16.mxu0 0
        %531 = vmatpush2.bf16.msra.mxu0 0
        %532 = vmatprep.subr.bf16.mxu0 0
        %533 = vmatpush2.bf16.msra.mxu0 0
        %534 = vmatprep.subr.bf16.mxu0 0
        %535 = vmatpush2.bf16.msra.mxu0 0
        %536 = vmatprep.subr.bf16.mxu0 0
        %537 = vmatpush2.bf16.msra.mxu0 0
        %538 = vmatprep.mubr.bf16.mxu0 0
        %539 = vmatmul.mubr.bf16.gmra.mxu0 %v501
        %v540 = vpop.f32.mrf.mxu0
        %v541 = vadd.f32 %v497, %v540
        %v542 = vpop.f32.mrf.mxu0
        %v543 = vpop.f32.mrf.mxu0
        %v544 = vadd.f32 %v497, %v543
        %v545 = vpop.f32.mrf.mxu0
        %546 = vmatprep.mubr.bf16.mxu0 0
        %547 = vmatmul.mubr.bf16.gmra.mxu0 %v504
        %v548 = vpop.f32.mrf.mxu0
        %v549 = vadd.f32 %v497, %v548
        %v550 = vpop.f32.mrf.mxu0
        %v551 = vpop.f32.mrf.mxu0
        %v552 = vpop.f32.mrf.mxu0
        %553 = vdwg.mxu0
        %v554 = vadd.f32 %v541, %v544
        %v555 = vadd.f32 %v554, %v549
        %v556 = vrot.slane %v555, 4
        %v557 = vadd.f32 %v555, %v556
        %v558 = vrot.slane %v557, 2
        %v559 = vadd.f32 %v557, %v558
        %v560 = vrot.slane %v559, 1
        %v561 = vadd.f32 %v559, %v560
        %v562 = vrcp.pop 24.0
        %v563 = vmul.f32 %v561, %v562
        %v564 = vsub.f32 %v541, %v563
        %v565 = vsub.f32 %v544, %v563
        %v566 = vsub.f32 %v549, %v563
        %v567 = vmul.f32 %v564, %v564
        %v568 = vmul.f32 %v565, %v565
        %v569 = vmul.f32 %v566, %v566
        %v570 = vadd.f32 %v567, %v568
        %v571 = vadd.f32 %v570, %v569
        %v572 = vrot.slane %v571, 4
        %v573 = vadd.f32 %v571, %v572
        %v574 = vrot.slane %v573, 2
        %v575 = vadd.f32 %v573, %v574
        %v576 = vrot.slane %v575, 1
        %v577 = vadd.f32 %v575, %v576
        %v578 = vmul.f32 %v577, 0.04347826
        %v579 = vlaneseq
        %v580 = vand.u32 %v579, 127
        %vm581 = vcmp.lt.s32.totalorder %v580, 8
        %v582 = vsel %vm581, %v578, 1.0
        %v583 = vrsqrt.pop %v582
        %v584 = vmul.f32 %v583, 0.20412415
        %v585 = vmul.f32 %v564, %v584
        %v586 = vmul.f32 %v565, %v584
        %v587 = vmul.f32 %v566, %v584
        %588 = vst [vmem:[%s259] sm:$0xff] %v585
        %589 = vst [vmem:[%s259 + $0x8] sm:$0xff] %v586
        %590 = vst [vmem:[%s259 + $0x10] sm:$0xff] %v587
        %s591 = sand.u32 %s164, 1
        %s592 = scalar_lea.sflag [#allocation3], %s591
        %s593 = sand.u32 %s164, 1
        %s594 = smul.addr %s593, 24
        %s595 = scalar_lea.vmem [#allocation2], %s594
        // Predicated region
        $region45: #{tpu_custom_call.1} parent=43 // pred_check
          %p596 = pneg %p174
        $region46: #{tpu_custom_call.1} parent=43 // pred_check_branch
          %598 = sbr.rel (%p596) target = $region48
        $region47: #{tpu_custom_call.1} parent=43 // pred_region
          %s600 = ssub.s32 384, 384
          %601 = vsyncadd %s592, %s600
          %s602 = smul.addr %s20, 3
          %s603 = smul.addr %s602, 128
          %s604 = scalar_lea.hbm %s6, %s603
          %s605 = sshll.u32 %s595, 4
          %s606 = int_to_ptr.vmem [resolvable:$true] %s605
          %611 = dma.vmem_to_hbm [thread:$0]  %s606, 384, %s604, %s592, 128, 128, 8
        $region48: #{tpu_custom_call.1} parent=43 // pred_fallthru
          _
      $region44: #{tpu_custom_call.1} parent=5 // pred_fallthru
        _
      %p612 = scmp.le.s32.totalorder 2, %s15
      // Predicated region
      $region49: #{tpu_custom_call.1} parent=5 // pred_check
        %p613 = pneg %p612
      $region50: #{tpu_custom_call.1} parent=5 // pred_check_branch
        %615 = sbr.rel (%p613) target = $region52
      $region51: #{tpu_custom_call.1} parent=5 // pred_region
        %s616 = ssub.s32 %s15, 2
        // Predicated region
        $region53: #{tpu_custom_call.1} parent=51 // pred_check
          %p617 = pneg %p180
        $region54: #{tpu_custom_call.1} parent=51 // pred_check_branch
          %619 = sbr.rel (%p617) target = $region56
        $region55: #{tpu_custom_call.1} parent=51 // pred_region
          %s620 = sand.u32 %s165, 1
          %s621 = scalar_lea.sflag [#allocation3], %s620
          %s622 = sand.u32 %s165, 1
          %s623 = smul.addr %s622, 24
          %s624 = scalar_lea.vmem [#allocation2], %s623
          %625 = dma.done %s621, 384
        $region56: #{tpu_custom_call.1} parent=51 // pred_fallthru
          _
      $region52: #{tpu_custom_call.1} parent=5 // pred_fallthru
        _
    $region6: #{tpu_custom_call.1} parent=1 // loop_footer
      %s19 = sadd.s32 1, %s15
    $region7: #{tpu_custom_call.1} parent=1 // loop_footer_branch
      %14 = sbr.rel target = $region3
    $region8: #{tpu_custom_call.1} parent=1 // loop_exit
      _
    %626 = vsyncpa [#allocation3], 1
    %s627 = scalar_lea.sflag [#allocation3], 1
    %628 = vsyncpa %s627, 1

</llo_original>
